<compile_context>
chip_gen: v7x
topology: tpu7x:2x2x1
jax: 0.10.0
libtpu: 0.0.40
codegen_flags: <defaults>
</compile_context>

<pallas_src>
import functools

import jax
import jax.numpy as jnp
from jax import lax
from jax.experimental import pallas as pl
from jax.experimental.pallas import tpu as pltpu


_W0_DEFAULT = 0.6707589561896
_W1_DEFAULT = 1.9640520507891586


def _partials_kernel(pred_ref, target_ref, parts_ref, *,
                     w0, w1, n_total, tile_n, needs_mask):
    """Per-block partial sums for weighted BCE + Dice.

    parts_ref block: (1, 4, B, 1)
      [0, 0] = per-row sum of weighted BCE loss
      [0, 1] = per-row sum(p * t)
      [0, 2] = per-row sum(p)
      [0, 3] = per-row sum(t)
    """
    p = pred_ref[...].astype(jnp.float32)      # (B, tile_n)
    t = target_ref[...].astype(jnp.float32)    # (B, tile_n)

    if needs_mask:
        # Tail block: columns beyond N hold stale VMEM -> mask them out.
        i = pl.program_id(0)
        limit = n_total - i * tile_n
        col = lax.broadcasted_iota(jnp.int32, p.shape, dimension=1)
        valid = col < limit
        p_log = jnp.where(valid, p, 0.5)       # safe argument for log()
        p = jnp.where(valid, p, 0.0)
        t = jnp.where(valid, t, 0.0)
    else:
        p_log = p

    # Weighted BCE, PyTorch F.binary_cross_entropy formulation
    # (per-element weight, log terms clamped at -100, mean taken later).
    w = t * w1 + (1.0 - t) * w0
    log_p = jnp.maximum(jnp.log(p_log), -100.0)
    log_1mp = jnp.maximum(jnp.log1p(-p_log), -100.0)
    loss = -w * (t * log_p + (1.0 - t) * log_1mp)
    if needs_mask:
        loss = jnp.where(valid, loss, 0.0)

    # Lane reductions: cross-vreg part is plain VPU adds, only the final
    # intra-vreg tree hits the XLU -> hidden under the HBM DMA.
    parts_ref[0, 0, :, :] = jnp.sum(loss, axis=1, keepdims=True)
    parts_ref[0, 1, :, :] = jnp.sum(p * t, axis=1, keepdims=True)
    parts_ref[0, 2, :, :] = jnp.sum(p, axis=1, keepdims=True)
    parts_ref[0, 3, :, :] = jnp.sum(t, axis=1, keepdims=True)


def _pick_tile_n(batch, n, itemsize, target_block_bytes=4 * 1024 * 1024):
    """Largest lane-aligned (multiple-of-128) feature tile with ~4 MiB blocks.

    Footprint ~= 2 inputs x 2 pipeline buffers x 4 MiB = 16 MiB, comfortably
    inside the 32 MiB scoped VMEM we request (also fits v7x's 64 MiB VMEM).
    """
    tile = (target_block_bytes // max(1, batch * itemsize)) // 128 * 128
    tile = max(128, int(tile))
    return n if tile >= n else tile


def bce_dice_loss_w(pred, target, *, weight_0=_W0_DEFAULT, weight_1=_W1_DEFAULT,
                    wb=1.0, wd=1.0, tile_n=None):
    """JAX/Pallas equivalent of BceDiceLossw().forward(pred, target).

    pred: probabilities in (0, 1), shape (B, ...); target: same shape, binary.
    f32 or bf16 inputs (cast to f32 inside the kernel). Returns a scalar f32.
    """
    B = pred.shape[0]
    p2 = pred.reshape(B, -1)
    t2 = target.reshape(B, -1)
    N = p2.shape[1]
    itemsize = jnp.dtype(p2.dtype).itemsize

    if tile_n is None:
        tile_n = _pick_tile_n(B, N, itemsize)
    tile_n = min(int(tile_n), N)
    if tile_n < N and tile_n % 128 != 0:
        tile_n = max(128, (tile_n // 128) * 128)

    grid = pl.cdiv(N, tile_n)
    needs_mask = (N % tile_n) != 0

    kernel = functools.partial(
        _partials_kernel, w0=float(weight_0), w1=float(weight_1),
        n_total=N, tile_n=tile_n, needs_mask=needs_mask)

    cost = pl.CostEstimate(
        flops=16 * B * N,
        transcendentals=2 * B * N,
        bytes_accessed=2 * B * N * itemsize + grid * 4 * B * 4)

    parts = pl.pallas_call(
        kernel,
        out_shape=jax.ShapeDtypeStruct((grid, 4, B, 1), jnp.float32),
        grid_spec=pltpu.PrefetchScalarGridSpec(
            num_scalar_prefetch=0,
            grid=(grid,),
            in_specs=[
                pl.BlockSpec((B, tile_n), lambda i: (0, i)),
                pl.BlockSpec((B, tile_n), lambda i: (0, i)),
            ],
            out_specs=pl.BlockSpec((1, 4, B, 1), lambda i: (i, 0, 0, 0)),
        ),
        compiler_params=pltpu.CompilerParams(
            dimension_semantics=("parallel",),
            vmem_limit_bytes=32 * 1024 * 1024),
        cost_estimate=cost,
    )(p2, t2)

    # Tiny final combine (grid x 4 x B floats) in plain JAX.
    sums = jnp.sum(parts[..., 0], axis=0)          # (4, B)
    bce = jnp.sum(sums[0]) / (B * N)               # reduction='mean'
    inter, p_sum, t_sum = sums[1], sums[2], sums[3]
    smooth = 1.0
    dice_score = (2.0 * inter + smooth) / (p_sum + t_sum + smooth)
    dice = 1.0 - jnp.sum(dice_score) / B
    return wd * dice + wb * bce


def _reference(pred, target, weight_0=_W0_DEFAULT, weight_1=_W1_DEFAULT,
               wb=1.0, wd=1.0):
    B = pred.shape[0]
    p = pred.reshape(B, -1).astype(jnp.float32)
    t = target.reshape(B, -1).astype(jnp.float32)
    w = t * weight_1 + (1.0 - t) * weight_0
    log_p = jnp.maximum(jnp.log(p), -100.0)
    log_1mp = jnp.maximum(jnp.log1p(-p), -100.0)
    bce = jnp.mean(-w * (t * log_p + (1.0 - t) * log_1mp))
    inter = jnp.sum(p * t, axis=1)
    dice_score = (2.0 * inter + 1.0) / (jnp.sum(p, axis=1) + jnp.sum(t, axis=1) + 1.0)
    dice = 1.0 - jnp.sum(dice_score) / B
    return wd * dice + wb * bce


if __name__ == "__main__":
    key = jax.random.PRNGKey(0)
    k1, k2 = jax.random.split(key)

    B, C, H, W = 2, 4, 16, 16
    logits = jax.random.normal(k1, (B, C, H, W), jnp.float32) * 2.0
    pred = jax.nn.sigmoid(logits)                                       # probabilities
    target = (jax.random.uniform(k2, (B, C, H, W)) > 0.5).astype(jnp.float32)

    ref = _reference(pred, target)

    # 1) default tiling (whole feature axis fits in one large block)
    loss = jax.block_until_ready(bce_dice_loss_w(pred, target))
    assert jnp.allclose(loss, ref, rtol=1e-5, atol=1e-5), (loss, ref)

    # 2) forced small tile -> multi-block "parallel" grid + ragged-tail mask path
    loss_tiled = jax.block_until_ready(bce_dice_loss_w(pred, target, tile_n=384))
    assert jnp.allclose(loss_tiled, ref, rtol=1e-5, atol=1e-5), (loss_tiled, ref)

    print("KERNEL_OK")
</pallas_src>

<mosaic_0001>
module attributes {stable_mosaic.version = 11 : i64} {
  func.func @_partials_kernel(%arg0: i32, %arg1: memref<2x1024xf32, #tpu.memory_space<vmem>>, %arg2: memref<2x1024xf32, #tpu.memory_space<vmem>>, %arg3: memref<1x4x2x1xf32, #tpu.memory_space<vmem>>) attributes {dimension_semantics = [#tpu.dimension_semantics<parallel>], iteration_bounds = array<i64: 1>, scalar_prefetch = 0 : i64, scratch_operands = 0 : i64, tpu.core_type = #tpu.core_type<tc>, window_params = [{transform_indices = @transform_0, window_bounds = array<i64: 2, 1024>}, {transform_indices = @transform_1, window_bounds = array<i64: 2, 1024>}, {transform_indices = @transform_2, window_bounds = array<i64: 1, 4, 2, 1>}]} {
    %c0 = arith.constant 0 : index
    %c0_0 = arith.constant 0 : index
    %0 = vector.load %arg1[%c0, %c0_0] : memref<2x1024xf32, #tpu.memory_space<vmem>>, vector<2x1024xf32>
    %c0_1 = arith.constant 0 : index
    %c0_2 = arith.constant 0 : index
    %1 = vector.load %arg2[%c0_1, %c0_2] : memref<2x1024xf32, #tpu.memory_space<vmem>>, vector<2x1024xf32>
    %cst = arith.constant 1.96405208 : f32
    %2 = vector.broadcast %cst : f32 to vector<2x1024xf32>
    %3 = arith.mulf %1, %2 : vector<2x1024xf32>
    %cst_3 = arith.constant 1.000000e+00 : f32
    %4 = vector.broadcast %cst_3 : f32 to vector<2x1024xf32>
    %5 = arith.subf %4, %1 : vector<2x1024xf32>
    %cst_4 = arith.constant 0.670758963 : f32
    %6 = vector.broadcast %cst_4 : f32 to vector<2x1024xf32>
    %7 = arith.mulf %5, %6 : vector<2x1024xf32>
    %8 = arith.addf %3, %7 : vector<2x1024xf32>
    %9 = math.log %0 : vector<2x1024xf32>
    %cst_5 = arith.constant -1.000000e+02 : f32
    %10 = vector.broadcast %cst_5 : f32 to vector<2x1024xf32>
    %11 = arith.maximumf %9, %10 : vector<2x1024xf32>
    %cst_6 = arith.constant 0.000000e+00 : f32
    %12 = vector.broadcast %cst_6 : f32 to vector<2x1024xf32>
    %13 = arith.subf %12, %0 : vector<2x1024xf32>
    %14 = math.log1p %13 : vector<2x1024xf32>
    %cst_7 = arith.constant -1.000000e+02 : f32
    %15 = vector.broadcast %cst_7 : f32 to vector<2x1024xf32>
    %16 = arith.maximumf %14, %15 : vector<2x1024xf32>
    %cst_8 = arith.constant 0.000000e+00 : f32
    %17 = vector.broadcast %cst_8 : f32 to vector<2x1024xf32>
    %18 = arith.subf %17, %8 : vector<2x1024xf32>
    %19 = arith.mulf %1, %11 : vector<2x1024xf32>
    %cst_9 = arith.constant 1.000000e+00 : f32
    %20 = vector.broadcast %cst_9 : f32 to vector<2x1024xf32>
    %21 = arith.subf %20, %1 : vector<2x1024xf32>
    %22 = arith.mulf %21, %16 : vector<2x1024xf32>
    %23 = arith.addf %19, %22 : vector<2x1024xf32>
    %24 = arith.mulf %18, %23 : vector<2x1024xf32>
    %cst_10 = arith.constant dense<0.000000e+00> : vector<2xf32>
    %25 = vector.multi_reduction <add>, %24, %cst_10 [1] : vector<2x1024xf32> to vector<2xf32>
    %26 = vector.shape_cast %25 : vector<2xf32> to vector<2x1xf32>
    %c0_11 = arith.constant 0 : index
    %c0_12 = arith.constant 0 : index
    %c0_13 = arith.constant 0 : index
    %c0_14 = arith.constant 0 : index
    %27 = vector.load %arg3[%c0_11, %c0_12, %c0_13, %c0_14] : memref<1x4x2x1xf32, #tpu.memory_space<vmem>>, vector<1x1x2x1xf32>
    %28 = vector.shape_cast %27 : vector<1x1x2x1xf32> to vector<2x1xf32>
    %29 = vector.shape_cast %26 : vector<2x1xf32> to vector<1x1x2x1xf32>
    tpu.vector_store %arg3[%c0_11, %c0_12, %c0_13, %c0_14], %29 {strides = array<i32>} : memref<1x4x2x1xf32, #tpu.memory_space<vmem>>, vector<1x1x2x1xf32>,
    %30 = arith.mulf %0, %1 : vector<2x1024xf32>
    %cst_15 = arith.constant dense<0.000000e+00> : vector<2xf32>
    %31 = vector.multi_reduction <add>, %30, %cst_15 [1] : vector<2x1024xf32> to vector<2xf32>
    %32 = vector.shape_cast %31 : vector<2xf32> to vector<2x1xf32>
    %c0_16 = arith.constant 0 : index
    %c1 = arith.constant 1 : index
    %c0_17 = arith.constant 0 : index
    %c0_18 = arith.constant 0 : index
    %33 = vector.load %arg3[%c0_16, %c1, %c0_17, %c0_18] : memref<1x4x2x1xf32, #tpu.memory_space<vmem>>, vector<1x1x2x1xf32>
    %34 = vector.shape_cast %33 : vector<1x1x2x1xf32> to vector<2x1xf32>
    %35 = vector.shape_cast %32 : vector<2x1xf32> to vector<1x1x2x1xf32>
    tpu.vector_store %arg3[%c0_16, %c1, %c0_17, %c0_18], %35 {strides = array<i32>} : memref<1x4x2x1xf32, #tpu.memory_space<vmem>>, vector<1x1x2x1xf32>,
    %cst_19 = arith.constant dense<0.000000e+00> : vector<2xf32>
    %36 = vector.multi_reduction <add>, %0, %cst_19 [1] : vector<2x1024xf32> to vector<2xf32>
    %37 = vector.shape_cast %36 : vector<2xf32> to vector<2x1xf32>
    %c0_20 = arith.constant 0 : index
    %c2 = arith.constant 2 : index
    %c0_21 = arith.constant 0 : index
    %c0_22 = arith.constant 0 : index
    %38 = vector.load %arg3[%c0_20, %c2, %c0_21, %c0_22] : memref<1x4x2x1xf32, #tpu.memory_space<vmem>>, vector<1x1x2x1xf32>
    %39 = vector.shape_cast %38 : vector<1x1x2x1xf32> to vector<2x1xf32>
    %40 = vector.shape_cast %37 : vector<2x1xf32> to vector<1x1x2x1xf32>
    tpu.vector_store %arg3[%c0_20, %c2, %c0_21, %c0_22], %40 {strides = array<i32>} : memref<1x4x2x1xf32, #tpu.memory_space<vmem>>, vector<1x1x2x1xf32>,
    %cst_23 = arith.constant dense<0.000000e+00> : vector<2xf32>
    %41 = vector.multi_reduction <add>, %1, %cst_23 [1] : vector<2x1024xf32> to vector<2xf32>
    %42 = vector.shape_cast %41 : vector<2xf32> to vector<2x1xf32>
    %c0_24 = arith.constant 0 : index
    %c3 = arith.constant 3 : index
    %c0_25 = arith.constant 0 : index
    %c0_26 = arith.constant 0 : index
    %43 = vector.load %arg3[%c0_24, %c3, %c0_25, %c0_26] : memref<1x4x2x1xf32, #tpu.memory_space<vmem>>, vector<1x1x2x1xf32>
    %44 = vector.shape_cast %43 : vector<1x1x2x1xf32> to vector<2x1xf32>
    %45 = vector.shape_cast %42 : vector<2x1xf32> to vector<1x1x2x1xf32>
    tpu.vector_store %arg3[%c0_24, %c3, %c0_25, %c0_26], %45 {strides = array<i32>} : memref<1x4x2x1xf32, #tpu.memory_space<vmem>>, vector<1x1x2x1xf32>,
    return
  }
  func.func @transform_0(%arg0: i32) -> (i32, i32) {
    %c0_i32 = arith.constant 0 : i32
    %c0_i32_0 = arith.constant 0 : i32
    return %c0_i32, %arg0 : i32, i32
  }
  func.func @transform_1(%arg0: i32) -> (i32, i32) {
    %c0_i32 = arith.constant 0 : i32
    %c0_i32_0 = arith.constant 0 : i32
    return %c0_i32, %arg0 : i32, i32
  }
  func.func @transform_2(%arg0: i32) -> (i32, i32, i32, i32) {
    %c0_i32 = arith.constant 0 : i32
    %c0_i32_0 = arith.constant 0 : i32
    %c0_i32_1 = arith.constant 0 : i32
    %c0_i32_2 = arith.constant 0 : i32
    return %arg0, %c0_i32, %c0_i32_0, %c0_i32_1 : i32, i32, i32, i32
  }
}

</mosaic_0001>

<llo_original>
// kernel: tpu_custom_call.1
$region0: #{tpu_custom_call.1}
  #allocation0 [shape = 'u32[]', space=smem, size = 0x4, offset = 0x4, fixed_abs, tag = 'smem constant byte address 0x4 - core index']
  #allocation1 [shape = 'u32[144,128]{1,0:T(1,128)}', space=vmem, size = 0x12000, scoped, tag = 'internal scratch']
  %s0 = inlined_call_operand.hbm [shape: f32[2,1024], index: 0, kind: input, shape index: {}]
  %s1 = inlined_call_operand.hbm [shape: f32[2,1024], index: 1, kind: input, shape index: {}]
  %s2 = inlined_call_operand.vmem [shape: f32[1,4,2,1], index: 2, kind: output, shape index: {}]
  %s3 = sld [smem:[#allocation0]]
  $region26: #{tpu_custom_call.1} parent=0
    _
  %s5 = ssub.s32 1, %s3
  %s6 = scalar_select 0, %s5, %s3
  $region1: #{tpu_custom_call.1} parent=0
    #allocation2 [shape = 'u8[8192]{0}', space=vmem, size = 0x2000, scoped, tag = 'input window, operand 0, single buffered']
    #allocation3 [shape = 's32[1]{0}', space=sflag, size = 0x4, scoped, tag = 'scoped memory for tpu_custom_call.1']
    #allocation4 [shape = 'u8[8192]{0}', space=vmem, size = 0x2000, scoped, tag = 'input window, operand 1, single buffered']
    #allocation5 [shape = 's32[1]{0}', space=sflag, size = 0x4, scoped, tag = 'scoped memory for tpu_custom_call.1']
    %7 = vsyncpa [#allocation3], 0
    %8 = vsyncpa [#allocation5], 0
    // Predicated region
    $region2: #{tpu_custom_call.1} parent=1 // pred_check
      _
    $region3: #{tpu_custom_call.1} parent=1 // pred_check_branch
      %10 = sbr.rel (0) target = $region5
    $region4: #{tpu_custom_call.1} parent=1 // pred_region
      %s12 = ssub.s32 256, 256
      %13 = vsyncadd [#allocation3], %s12
      %s15 = sshll.u32 [#allocation2], 4
      %s16 = int_to_ptr.vmem [resolvable:$true] %s15
      %18 = dma.hbm_to_vmem [thread:$0]  %s0, 256, %s16, [#allocation3]
    $region5: #{tpu_custom_call.1} parent=1 // pred_fallthru
      _
    // Predicated region
    $region6: #{tpu_custom_call.1} parent=1 // pred_check
      _
    $region7: #{tpu_custom_call.1} parent=1 // pred_check_branch
      %20 = sbr.rel (0) target = $region9
    $region8: #{tpu_custom_call.1} parent=1 // pred_region
      %s22 = ssub.s32 256, 256
      %23 = vsyncadd [#allocation5], %s22
      %s25 = sshll.u32 [#allocation4], 4
      %s26 = int_to_ptr.vmem [resolvable:$true] %s25
      %28 = dma.hbm_to_vmem [thread:$0]  %s1, 256, %s26, [#allocation5]
    $region9: #{tpu_custom_call.1} parent=1 // pred_fallthru
      _
    // Predicated region
    $region10: #{tpu_custom_call.1} parent=1 // pred_check
      _
    $region11: #{tpu_custom_call.1} parent=1 // pred_check_branch
      %30 = sbr.rel (0) target = $region13
    $region12: #{tpu_custom_call.1} parent=1 // pred_region
      %31 = dma.done [#allocation3], 256
    $region13: #{tpu_custom_call.1} parent=1 // pred_fallthru
      _
    // Predicated region
    $region14: #{tpu_custom_call.1} parent=1 // pred_check
      _
    $region15: #{tpu_custom_call.1} parent=1 // pred_check_branch
      %33 = sbr.rel (0) target = $region17
    $region16: #{tpu_custom_call.1} parent=1 // pred_region
      %34 = dma.done [#allocation5], 256
    $region17: #{tpu_custom_call.1} parent=1 // pred_fallthru
      _
    %v35 = vld [vmem:[#allocation2] sm:$0xff]
    %v36 = vld [vmem:[#allocation2 + $0x8] sm:$0xff]
    %v37 = vld [vmem:[#allocation4] sm:$0xff]
    %v38 = vld [vmem:[#allocation4 + $0x8] sm:$0xff]
    %v39 = vmul.f32 %v37, 1.9640521
    %v40 = vmul.f32 %v38, 1.9640521
    %v41 = vsub.f32 1.0, %v37
    %v42 = vsub.f32 1.0, %v38
    %v43 = vmul.f32 %v41, 0.67075896
    %v44 = vmul.f32 %v42, 0.67075896
    %v45 = vadd.f32 %v39, %v43
    %v46 = vadd.f32 %v40, %v44
    %v47 = vlog2.pop %v35
    %v48 = vmul.f32 %v47, 0.6931472
    %v49 = vlog2.pop %v36
    %v50 = vmul.f32 %v49, 0.6931472
    %v51 = vmax.f32 %v48, -100.0
    %v52 = vmax.f32 %v50, -100.0
    %v53 = vsub.f32 0.0, %v35
    %v54 = vsub.f32 0.0, %v36
    %v55 = vadd.f32 %v53, 1.0
    %v56 = vlog2.pop %v55
    %v57 = vmul.f32 %v56, 0.6931472
    %v58 = vmul.f32 -0.5, %v53
    %v59 = vadd.f32 %v58, 1.0
    %v60 = vmul.f32 %v59, %v53
    %v61 = vand.u32 2147483647, %v53
    %vm62 = vcmp.lt.f32.partialorder %v61, 0.0004427343
    %v63 = vsel %vm62, %v60, %v57
    %v64 = vadd.f32 %v54, 1.0
    %v65 = vlog2.pop %v64
    %v66 = vmul.f32 %v65, 0.6931472
    %v67 = vmul.f32 -0.5, %v54
    %v68 = vadd.f32 %v67, 1.0
    %v69 = vmul.f32 %v68, %v54
    %v70 = vand.u32 2147483647, %v54
    %vm71 = vcmp.lt.f32.partialorder %v70, 0.0004427343
    %v72 = vsel %vm71, %v69, %v66
    %v73 = vmax.f32 %v63, -100.0
    %v74 = vmax.f32 %v72, -100.0
    %v75 = vsub.f32 0.0, %v45
    %v76 = vsub.f32 0.0, %v46
    %v77 = vmul.f32 %v37, %v51
    %v78 = vmul.f32 %v38, %v52
    %v79 = vmul.f32 %v41, %v73
    %v80 = vmul.f32 %v42, %v74
    %v81 = vadd.f32 %v77, %v79
    %v82 = vadd.f32 %v78, %v80
    %v83 = vmul.f32 %v75, %v81
    %v84 = vmul.f32 %v76, %v82
    %v87 = vcombine.high %v83, %v83
    %v89 = vunpack.c.l.s4 1983009808
    %v90 = vunpack.c.0.s8 %v89
    %v91 = vlaneseq
    %v92 = vshrl.u32 %v91, 7
    %v93 = vsub.s32 %v90, %v92
    %v94 = vrot.slane %v83, %v93
    %v96 = vunpack.c.l.s4 1983009808
    %v97 = vunpack.c.0.s8 %v96
    %v98 = vlaneseq
    %v99 = vshrl.u32 %v98, 7
    %v100 = vsub.s32 %v97, %v99
    %v101 = vrot.slane %v87, %v100
    %v102 = vcombine.high %v94, %v94
    %v103 = vcombine.high %v101, %v101
    %v104 = vcombine.high %v84, %v84
    %v106 = vunpack.c.l.s4 1983009808
    %v107 = vunpack.c.0.s8 %v106
    %v108 = vlaneseq
    %v109 = vshrl.u32 %v108, 7
    %v110 = vsub.s32 %v107, %v109
    %v111 = vrot.slane %v84, %v110
    %v113 = vunpack.c.l.s4 1983009808
    %v114 = vunpack.c.0.s8 %v113
    %v115 = vlaneseq
    %v116 = vshrl.u32 %v115, 7
    %v117 = vsub.s32 %v114, %v116
    %v118 = vrot.slane %v104, %v117
    %v119 = vcombine.high %v111, %v111
    %v120 = vcombine.high %v118, %v118
    %vm129 = vcmask 1041408
    %v130 = vsel %vm129, %v94, 0.0
    %v131 = vsel %vm129, %v102, 0.0
    %v132 = vadd.f32 %v130, %v131
    %v133 = vsel %vm129, %v101, 0.0
    %v134 = vadd.f32 %v132, %v133
    %v135 = vsel %vm129, %v103, 0.0
    %v136 = vadd.f32 %v134, %v135
    %v137 = vsel %vm129, %v111, 0.0
    %v138 = vadd.f32 %v136, %v137
    %v139 = vsel %vm129, %v119, 0.0
    %v140 = vadd.f32 %v138, %v139
    %v141 = vsel %vm129, %v118, 0.0
    %v142 = vadd.f32 %v140, %v141
    %v143 = vsel %vm129, %v120, 0.0
    %v144 = vadd.f32 %v142, %v143
    %145 = vadd.xlane.f32.xlu0 %v144
    %v146 = vpop.xlane.xlu0 %145
    %vm147 = vcmask 1024
    %148 = vst.msk [vmem:[%s2] sm:$0x3] %vm147, %v146
    %v149 = vmul.f32 %v35, %v37
    %v150 = vmul.f32 %v36, %v38
    %v153 = vcombine.high %v149, %v149
    %v155 = vunpack.c.l.s4 1983009808
    %v156 = vunpack.c.0.s8 %v155
    %v157 = vlaneseq
    %v158 = vshrl.u32 %v157, 7
    %v159 = vsub.s32 %v156, %v158
    %v160 = vrot.slane %v149, %v159
    %v162 = vunpack.c.l.s4 1983009808
    %v163 = vunpack.c.0.s8 %v162
    %v164 = vlaneseq
    %v165 = vshrl.u32 %v164, 7
    %v166 = vsub.s32 %v163, %v165
    %v167 = vrot.slane %v153, %v166
    %v168 = vcombine.high %v160, %v160
    %v169 = vcombine.high %v167, %v167
    %v170 = vcombine.high %v150, %v150
    %v172 = vunpack.c.l.s4 1983009808
    %v173 = vunpack.c.0.s8 %v172
    %v174 = vlaneseq
    %v175 = vshrl.u32 %v174, 7
    %v176 = vsub.s32 %v173, %v175
    %v177 = vrot.slane %v150, %v176
    %v179 = vunpack.c.l.s4 1983009808
    %v180 = vunpack.c.0.s8 %v179
    %v181 = vlaneseq
    %v182 = vshrl.u32 %v181, 7
    %v183 = vsub.s32 %v180, %v182
    %v184 = vrot.slane %v170, %v183
    %v185 = vcombine.high %v177, %v177
    %v186 = vcombine.high %v184, %v184
    %v195 = vsel %vm129, %v160, 0.0
    %v196 = vsel %vm129, %v168, 0.0
    %v197 = vadd.f32 %v195, %v196
    %v198 = vsel %vm129, %v167, 0.0
    %v199 = vadd.f32 %v197, %v198
    %v200 = vsel %vm129, %v169, 0.0
    %v201 = vadd.f32 %v199, %v200
    %v202 = vsel %vm129, %v177, 0.0
    %v203 = vadd.f32 %v201, %v202
    %v204 = vsel %vm129, %v185, 0.0
    %v205 = vadd.f32 %v203, %v204
    %v206 = vsel %vm129, %v184, 0.0
    %v207 = vadd.f32 %v205, %v206
    %v208 = vsel %vm129, %v186, 0.0
    %v209 = vadd.f32 %v207, %v208
    %210 = vadd.xlane.f32.xlu0 %v209
    %v211 = vpop.xlane.xlu0 %210
    %s212 = scalar_lea.vmem %s2, 2
    %213 = vst.msk [vmem:[%s212] sm:$0x3] %vm147, %v211
    %v216 = vcombine.high %v35, %v35
    %v218 = vunpack.c.l.s4 1983009808
    %v219 = vunpack.c.0.s8 %v218
    %v220 = vlaneseq
    %v221 = vshrl.u32 %v220, 7
    %v222 = vsub.s32 %v219, %v221
    %v223 = vrot.slane %v35, %v222
    %v225 = vunpack.c.l.s4 1983009808
    %v226 = vunpack.c.0.s8 %v225
    %v227 = vlaneseq
    %v228 = vshrl.u32 %v227, 7
    %v229 = vsub.s32 %v226, %v228
    %v230 = vrot.slane %v216, %v229
    %v231 = vcombine.high %v223, %v223
    %v232 = vcombine.high %v230, %v230
    %v233 = vcombine.high %v36, %v36
    %v235 = vunpack.c.l.s4 1983009808
    %v236 = vunpack.c.0.s8 %v235
    %v237 = vlaneseq
    %v238 = vshrl.u32 %v237, 7
    %v239 = vsub.s32 %v236, %v238
    %v240 = vrot.slane %v36, %v239
    %v242 = vunpack.c.l.s4 1983009808
    %v243 = vunpack.c.0.s8 %v242
    %v244 = vlaneseq
    %v245 = vshrl.u32 %v244, 7
    %v246 = vsub.s32 %v243, %v245
    %v247 = vrot.slane %v233, %v246
    %v248 = vcombine.high %v240, %v240
    %v249 = vcombine.high %v247, %v247
    %v258 = vsel %vm129, %v223, 0.0
    %v259 = vsel %vm129, %v231, 0.0
    %v260 = vadd.f32 %v258, %v259
    %v261 = vsel %vm129, %v230, 0.0
    %v262 = vadd.f32 %v260, %v261
    %v263 = vsel %vm129, %v232, 0.0
    %v264 = vadd.f32 %v262, %v263
    %v265 = vsel %vm129, %v240, 0.0
    %v266 = vadd.f32 %v264, %v265
    %v267 = vsel %vm129, %v248, 0.0
    %v268 = vadd.f32 %v266, %v267
    %v269 = vsel %vm129, %v247, 0.0
    %v270 = vadd.f32 %v268, %v269
    %v271 = vsel %vm129, %v249, 0.0
    %v272 = vadd.f32 %v270, %v271
    %273 = vadd.xlane.f32.xlu0 %v272
    %v274 = vpop.xlane.xlu0 %273
    %s275 = scalar_lea.vmem %s2, 4
    %276 = vst.msk [vmem:[%s275] sm:$0x3] %vm147, %v274
    %v279 = vcombine.high %v37, %v37
    %v281 = vunpack.c.l.s4 1983009808
    %v282 = vunpack.c.0.s8 %v281
    %v283 = vlaneseq
    %v284 = vshrl.u32 %v283, 7
    %v285 = vsub.s32 %v282, %v284
    %v286 = vrot.slane %v37, %v285
    %v288 = vunpack.c.l.s4 1983009808
    %v289 = vunpack.c.0.s8 %v288
    %v290 = vlaneseq
    %v291 = vshrl.u32 %v290, 7
    %v292 = vsub.s32 %v289, %v291
    %v293 = vrot.slane %v279, %v292
    %v294 = vcombine.high %v286, %v286
    %v295 = vcombine.high %v293, %v293
    %v296 = vcombine.high %v38, %v38
    %v298 = vunpack.c.l.s4 1983009808
    %v299 = vunpack.c.0.s8 %v298
    %v300 = vlaneseq
    %v301 = vshrl.u32 %v300, 7
    %v302 = vsub.s32 %v299, %v301
    %v303 = vrot.slane %v38, %v302
    %v305 = vunpack.c.l.s4 1983009808
    %v306 = vunpack.c.0.s8 %v305
    %v307 = vlaneseq
    %v308 = vshrl.u32 %v307, 7
    %v309 = vsub.s32 %v306, %v308
    %v310 = vrot.slane %v296, %v309
    %v311 = vcombine.high %v303, %v303
    %v312 = vcombine.high %v310, %v310
    %v321 = vsel %vm129, %v286, 0.0
    %v322 = vsel %vm129, %v294, 0.0
    %v323 = vadd.f32 %v321, %v322
    %v324 = vsel %vm129, %v293, 0.0
    %v325 = vadd.f32 %v323, %v324
    %v326 = vsel %vm129, %v295, 0.0
    %v327 = vadd.f32 %v325, %v326
    %v328 = vsel %vm129, %v303, 0.0
    %v329 = vadd.f32 %v327, %v328
    %v330 = vsel %vm129, %v311, 0.0
    %v331 = vadd.f32 %v329, %v330
    %v332 = vsel %vm129, %v310, 0.0
    %v333 = vadd.f32 %v331, %v332
    %v334 = vsel %vm129, %v312, 0.0
    %v335 = vadd.f32 %v333, %v334
    %336 = vadd.xlane.f32.xlu0 %v335
    %v337 = vpop.xlane.xlu0 %336
    %s338 = scalar_lea.vmem %s2, 6
    %339 = vst.msk [vmem:[%s338] sm:$0x3] %vm147, %v337
    // Predicated region
    $region18: #{tpu_custom_call.1} parent=1 // pred_check
      _
    $region19: #{tpu_custom_call.1} parent=1 // pred_check_branch
      %341 = sbr.rel (0) target = $region21
    $region20: #{tpu_custom_call.1} parent=1 // pred_region
      _
    $region21: #{tpu_custom_call.1} parent=1 // pred_fallthru
      _
    // Predicated region
    $region22: #{tpu_custom_call.1} parent=1 // pred_check
      _
    $region23: #{tpu_custom_call.1} parent=1 // pred_check_branch
      %343 = sbr.rel (0) target = $region25
    $region24: #{tpu_custom_call.1} parent=1 // pred_region
      _
    $region25: #{tpu_custom_call.1} parent=1 // pred_fallthru
      _
    %344 = vsyncpa [#allocation3], 1
    %345 = vsyncpa [#allocation5], 1

</llo_original>
